<compile_context>
chip_gen: v5e
topology: v5e:2x2
jax: 0.10.0
libtpu: 0.0.40
codegen_flags: <defaults>
</compile_context>

<pallas_src>
import jax
import jax.numpy as jnp
from jax.experimental import pallas as pl
from jax.experimental.pallas import tpu as pltpu

NEG_SLOPE = 0.01   # nn.LeakyReLU(negative_slope)
ELU_ALPHA = 0.01   # nn.ELU(alpha=0.01)  (module explicitly passes alpha=0.01)
ELU_BETA = 0.01    # custom ELU wrapper adds beta=0.01

LANE = 128


def _leaky_relu(x):
    return jnp.where(x >= 0, x, NEG_SLOPE * x)


def _elu_plus_beta(x):
    # exp only on the non-positive range so the unselected branch can't overflow.
    neg = ELU_ALPHA * (jnp.exp(jnp.minimum(x, 0.0)) - 1.0)
    return jnp.where(x > 0, x, neg) + ELU_BETA


def _round_up(n, m):
    return ((n + m - 1) // m) * m


def autoencoder_kernel(x_ref,
                       w1_ref, b1_ref,     # Linear(input_dim -> hidden)      [bf16 / f32]
                       w23_ref, b23_ref,   # fused Linear(hidden -> hidden)   [bf16 / f32]
                       w4_ref, b4_ref,     # Linear(hidden -> input_dim)      [bf16 / f32]
                       out_ref):
    bf16 = jnp.bfloat16
    x = x_ref[...].astype(bf16)

    # encoder Linear1 + LeakyReLU
    h = jnp.dot(x, w1_ref[...], preferred_element_type=jnp.float32) + b1_ref[...]
    h = _leaky_relu(h)

    # fused (encoder Linear2 -> decoder Linear1) + LeakyReLU
    d = jnp.dot(h.astype(bf16), w23_ref[...],
                preferred_element_type=jnp.float32) + b23_ref[...]
    d = _leaky_relu(d)

    # decoder Linear2 + ELU(alpha=0.01) + beta
    o = jnp.dot(d.astype(bf16), w4_ref[...],
                preferred_element_type=jnp.float32) + b4_ref[...]
    o = _elu_plus_beta(o)

    out_ref[...] = o.astype(out_ref.dtype)


def autoencoder_image_forward(x, params, *, max_tile_b=512, out_dtype=jnp.float32):
    """x: [B, input_dim] float32; params: dict of (in,out) weights + (1,out) biases."""
    B, input_dim = x.shape
    hidden = params["w1"].shape[1]

    # --- pad feature dims to full 128-lane vregs / MXU columns (zero padding is inert) ---
    din_p = _round_up(input_dim, LANE)
    h_p = _round_up(hidden, LANE)

    # --- batch tiling (rows multiple of 16 for clean bf16 sublane packing) ---
    if B < 32:
        tile_b = _round_up(B, 16)                    # one step; whole (tiny) batch
    elif B <= 2 * max_tile_b:
        tile_b = _round_up(-(-B // 2), 16)           # >= 2 balanced steps (v7x megacore)
    else:
        tile_b = max_tile_b
    b_p = _round_up(B, tile_b)
    grid = (b_p // tile_b,)

    # --- fuse the two middle linear layers in f32, then cast weights to bf16 ---
    w23 = jnp.dot(params["w2"], params["w3"], preferred_element_type=jnp.float32)
    b23 = jnp.dot(params["b2"], params["w3"], preferred_element_type=jnp.float32) + params["b3"]

    def pad2(a, rows, cols, dtype):
        a = jnp.pad(a, ((0, rows - a.shape[0]), (0, cols - a.shape[1])))
        return a.astype(dtype)

    xp = pad2(x, b_p, din_p, x.dtype)
    w1 = pad2(params["w1"], din_p, h_p, jnp.bfloat16)
    b1 = pad2(params["b1"], 1, h_p, jnp.float32)
    w23 = pad2(w23, h_p, h_p, jnp.bfloat16)
    b23 = pad2(b23, 1, h_p, jnp.float32)
    w4 = pad2(params["w4"], h_p, din_p, jnp.bfloat16)
    b4 = pad2(params["b4"], 1, din_p, jnp.float32)

    out_itemsize = jnp.dtype(out_dtype).itemsize

    # advisory cost estimate: 3 matmuls + one exp per output element
    flops = 2 * b_p * (din_p * h_p + h_p * h_p + h_p * din_p)
    weight_bytes = (2 * (w1.size + w23.size + w4.size)
                    + 4 * (b1.size + b23.size + b4.size))
    cost = pl.CostEstimate(
        flops=int(flops),
        transcendentals=int(b_p * din_p),
        bytes_accessed=int(weight_bytes + 4 * b_p * din_p + out_itemsize * b_p * din_p),
    )

    # VMEM budget: double-buffered x/out tiles + single-buffered params
    # + f32 intermediates (h, d, o) + bf16 cast temporaries + compiler slack.
    tile_io = 2 * tile_b * din_p * (4 + out_itemsize)
    intermediates = tile_b * (2 * h_p + 2 * din_p) * 4 + tile_b * (din_p + 2 * h_p) * 2
    vmem_bytes = tile_io + weight_bytes + intermediates + (4 << 20)
    vmem_bytes = int(min(max(vmem_bytes, 16 << 20), 48 << 20))  # headroom under v7x's 64 MiB

    const = lambda i: (0, 0)
    wkw = dict(pipeline_mode=pl.Buffered(1))  # constant operands: single VMEM buffer
    in_specs = [
        pl.BlockSpec((tile_b, din_p), lambda i: (i, 0)),   # x tile (double-buffered)
        pl.BlockSpec((din_p, h_p), const, **wkw),          # w1  (bf16)
        pl.BlockSpec((1, h_p), const, **wkw),              # b1
        pl.BlockSpec((h_p, h_p), const, **wkw),            # w23 (bf16)
        pl.BlockSpec((1, h_p), const, **wkw),              # b23
        pl.BlockSpec((h_p, din_p), const, **wkw),          # w4  (bf16)
        pl.BlockSpec((1, din_p), const, **wkw),            # b4
    ]
    out_spec = pl.BlockSpec((tile_b, din_p), lambda i: (i, 0))

    out = pl.pallas_call(
        autoencoder_kernel,
        out_shape=jax.ShapeDtypeStruct((b_p, din_p), out_dtype),
        grid_spec=pltpu.PrefetchScalarGridSpec(
            num_scalar_prefetch=0,
            grid=grid,
            in_specs=in_specs,
            out_specs=out_spec,
        ),
        compiler_params=pltpu.CompilerParams(
            dimension_semantics=("parallel",),
            vmem_limit_bytes=vmem_bytes),
        cost_estimate=cost,
    )(xp, w1, b1, w23, b23, w4, b4)

    return out[:B, :input_dim]


def init_params(key, input_dim, latent_dim, hidden):
    """Deterministic synthetic parameters (shapes match the nn.Module __init__)."""
    ks = jax.random.split(key, 8)

    def lin(kw, kb, fan_in, fan_out):
        scale = 1.0 / jnp.sqrt(fan_in)
        w = jax.random.uniform(kw, (fan_in, fan_out), jnp.float32, -scale, scale)
        b = jax.random.uniform(kb, (1, fan_out), jnp.float32, -scale, scale)
        return w, b

    w1, b1 = lin(ks[0], ks[1], input_dim, hidden)    # encoder[0]
    w2, b2 = lin(ks[2], ks[3], hidden, latent_dim)   # encoder[2]
    w3, b3 = lin(ks[4], ks[5], latent_dim, hidden)   # decoder[0]
    w4, b4 = lin(ks[6], ks[7], hidden, input_dim)    # decoder[2]
    return dict(w1=w1, b1=b1, w2=w2, b2=b2, w3=w3, b3=b3, w4=w4, b4=b4)


def reference_forward_f32(x, p):
    """Pure-f32 reference with the exact PyTorch module structure."""
    h = _leaky_relu(jnp.dot(x, p["w1"]) + p["b1"])
    z = jnp.dot(h, p["w2"]) + p["b2"]
    d = _leaky_relu(jnp.dot(z, p["w3"]) + p["b3"])
    return _elu_plus_beta(jnp.dot(d, p["w4"]) + p["b4"])


def reference_forward_fused_bf16(x, p):
    """Mirrors the kernel math: fused middle layers, bf16 operands, f32 accumulation."""
    bf16 = jnp.bfloat16
    w23 = jnp.dot(p["w2"], p["w3"], preferred_element_type=jnp.float32).astype(bf16)
    b23 = jnp.dot(p["b2"], p["w3"], preferred_element_type=jnp.float32) + p["b3"]

    def mm(a, w):
        return jnp.dot(a.astype(bf16), w, preferred_element_type=jnp.float32)

    h = _leaky_relu(mm(x, p["w1"].astype(bf16)) + p["b1"])
    d = _leaky_relu(mm(h, w23) + b23)
    return _elu_plus_beta(mm(d, p["w4"].astype(bf16)) + p["b4"])


if __name__ == "__main__":
    key = jax.random.PRNGKey(0)
    k_x, k_p = jax.random.split(key)

    # small, module-consistent shapes
    batch, input_dim, latent_dim, hidden = 16, 256, 64, 128

    x = jax.random.normal(k_x, (batch, input_dim), jnp.float32)
    params = init_params(k_p, input_dim, latent_dim, hidden)

    out = jax.block_until_ready(autoencoder_image_forward(x, params))

    assert out.shape == (batch, input_dim)
    assert out.dtype == jnp.float32

    # tight check against a reference using identical bf16-operand / fused-middle math
    ref_bf16 = reference_forward_fused_bf16(x, params)
    assert jnp.allclose(out, ref_bf16, atol=2e-3, rtol=2e-3), "mismatch vs bf16/fused reference"

    # looser sanity check against the pure-f32 (unfused) module semantics
    ref_f32 = reference_forward_f32(x, params)
    assert jnp.allclose(out, ref_f32, atol=5e-2, rtol=5e-2), "mismatch vs f32 reference"

    print("KERNEL_OK")
</pallas_src>

<mosaic_0001>
module attributes {stable_mosaic.version = 11 : i64} {
  func.func @autoencoder_kernel(%arg0: i32, %arg1: memref<16x256xf32, #tpu.memory_space<vmem>>, %arg2: memref<256x128xbf16, #tpu.memory_space<vmem>>, %arg3: memref<1x128xf32, #tpu.memory_space<vmem>>, %arg4: memref<128x128xbf16, #tpu.memory_space<vmem>>, %arg5: memref<1x128xf32, #tpu.memory_space<vmem>>, %arg6: memref<128x256xbf16, #tpu.memory_space<vmem>>, %arg7: memref<1x256xf32, #tpu.memory_space<vmem>>, %arg8: memref<16x256xf32, #tpu.memory_space<vmem>>) attributes {dimension_semantics = [#tpu.dimension_semantics<parallel>], iteration_bounds = array<i64: 1>, scalar_prefetch = 0 : i64, scratch_operands = 0 : i64, tpu.core_type = #tpu.core_type<tc>, window_params = [{transform_indices = @transform_0, window_bounds = array<i64: 16, 256>}, {pipeline_mode = #tpu.pipeline_mode<synchronous>, transform_indices = @transform_1, window_bounds = array<i64: 256, 128>}, {pipeline_mode = #tpu.pipeline_mode<synchronous>, transform_indices = @transform_2, window_bounds = array<i64: 1, 128>}, {pipeline_mode = #tpu.pipeline_mode<synchronous>, transform_indices = @transform_3, window_bounds = array<i64: 128, 128>}, {pipeline_mode = #tpu.pipeline_mode<synchronous>, transform_indices = @transform_4, window_bounds = array<i64: 1, 128>}, {pipeline_mode = #tpu.pipeline_mode<synchronous>, transform_indices = @transform_5, window_bounds = array<i64: 128, 256>}, {pipeline_mode = #tpu.pipeline_mode<synchronous>, transform_indices = @transform_6, window_bounds = array<i64: 1, 256>}, {transform_indices = @transform_7, window_bounds = array<i64: 16, 256>}]} {
    %c0 = arith.constant 0 : index
    %c0_0 = arith.constant 0 : index
    %0 = vector.load %arg1[%c0, %c0_0] : memref<16x256xf32, #tpu.memory_space<vmem>>, vector<16x256xf32>
    %1 = arith.truncf %0 : vector<16x256xf32> to vector<16x256xbf16>
    %c0_1 = arith.constant 0 : index
    %c0_2 = arith.constant 0 : index
    %2 = vector.load %arg2[%c0_1, %c0_2] : memref<256x128xbf16, #tpu.memory_space<vmem>>, vector<256x128xbf16>
    %cst = arith.constant dense<0.000000e+00> : vector<16x128xf32>
    %3 = tpu.matmul %1, %2, %cst {dimension_numbers = #tpu.dot_dimension_numbers<[1], [0], [0], [1], [0, 0, 1, 1], [], []>} : vector<16x256xbf16>, vector<256x128xbf16>, vector<16x128xf32> -> vector<16x128xf32>
    %c0_3 = arith.constant 0 : index
    %c0_4 = arith.constant 0 : index
    %4 = vector.load %arg3[%c0_3, %c0_4] : memref<1x128xf32, #tpu.memory_space<vmem>>, vector<1x128xf32>
    %5 = vector.broadcast %4 : vector<1x128xf32> to vector<16x128xf32>
    %6 = arith.addf %3, %5 : vector<16x128xf32>
    %cst_5 = arith.constant 0.000000e+00 : f32
    %7 = vector.broadcast %cst_5 : f32 to vector<16x128xf32>
    %8 = arith.cmpf oge, %6, %7 : vector<16x128xf32>
    %cst_6 = arith.constant 0.00999999977 : f32
    %9 = vector.broadcast %cst_6 : f32 to vector<16x128xf32>
    %10 = arith.mulf %9, %6 : vector<16x128xf32>
    %11 = arith.select %8, %6, %10 : vector<16x128xi1>, vector<16x128xf32>
    %12 = arith.truncf %11 : vector<16x128xf32> to vector<16x128xbf16>
    %c0_7 = arith.constant 0 : index
    %c0_8 = arith.constant 0 : index
    %13 = vector.load %arg4[%c0_7, %c0_8] : memref<128x128xbf16, #tpu.memory_space<vmem>>, vector<128x128xbf16>
    %cst_9 = arith.constant dense<0.000000e+00> : vector<16x128xf32>
    %14 = tpu.matmul %12, %13, %cst_9 {dimension_numbers = #tpu.dot_dimension_numbers<[1], [0], [0], [1], [0, 0, 1, 1], [], []>} : vector<16x128xbf16>, vector<128x128xbf16>, vector<16x128xf32> -> vector<16x128xf32>
    %c0_10 = arith.constant 0 : index
    %c0_11 = arith.constant 0 : index
    %15 = vector.load %arg5[%c0_10, %c0_11] : memref<1x128xf32, #tpu.memory_space<vmem>>, vector<1x128xf32>
    %16 = vector.broadcast %15 : vector<1x128xf32> to vector<16x128xf32>
    %17 = arith.addf %14, %16 : vector<16x128xf32>
    %cst_12 = arith.constant 0.000000e+00 : f32
    %18 = vector.broadcast %cst_12 : f32 to vector<16x128xf32>
    %19 = arith.cmpf oge, %17, %18 : vector<16x128xf32>
    %cst_13 = arith.constant 0.00999999977 : f32
    %20 = vector.broadcast %cst_13 : f32 to vector<16x128xf32>
    %21 = arith.mulf %20, %17 : vector<16x128xf32>
    %22 = arith.select %19, %17, %21 : vector<16x128xi1>, vector<16x128xf32>
    %23 = arith.truncf %22 : vector<16x128xf32> to vector<16x128xbf16>
    %c0_14 = arith.constant 0 : index
    %c0_15 = arith.constant 0 : index
    %24 = vector.load %arg6[%c0_14, %c0_15] : memref<128x256xbf16, #tpu.memory_space<vmem>>, vector<128x256xbf16>
    %cst_16 = arith.constant dense<0.000000e+00> : vector<16x256xf32>
    %25 = tpu.matmul %23, %24, %cst_16 {dimension_numbers = #tpu.dot_dimension_numbers<[1], [0], [0], [1], [0, 0, 1, 1], [], []>} : vector<16x128xbf16>, vector<128x256xbf16>, vector<16x256xf32> -> vector<16x256xf32>
    %c0_17 = arith.constant 0 : index
    %c0_18 = arith.constant 0 : index
    %26 = vector.load %arg7[%c0_17, %c0_18] : memref<1x256xf32, #tpu.memory_space<vmem>>, vector<1x256xf32>
    %27 = vector.broadcast %26 : vector<1x256xf32> to vector<16x256xf32>
    %28 = arith.addf %25, %27 : vector<16x256xf32>
    %cst_19 = arith.constant 0.000000e+00 : f32
    %29 = vector.broadcast %cst_19 : f32 to vector<16x256xf32>
    %30 = arith.minimumf %28, %29 : vector<16x256xf32>
    %31 = math.exp %30 : vector<16x256xf32>
    %cst_20 = arith.constant 1.000000e+00 : f32
    %32 = vector.broadcast %cst_20 : f32 to vector<16x256xf32>
    %33 = arith.subf %31, %32 : vector<16x256xf32>
    %cst_21 = arith.constant 0.00999999977 : f32
    %34 = vector.broadcast %cst_21 : f32 to vector<16x256xf32>
    %35 = arith.mulf %34, %33 : vector<16x256xf32>
    %cst_22 = arith.constant 0.000000e+00 : f32
    %36 = vector.broadcast %cst_22 : f32 to vector<16x256xf32>
    %37 = arith.cmpf ogt, %28, %36 : vector<16x256xf32>
    %38 = arith.select %37, %28, %35 : vector<16x256xi1>, vector<16x256xf32>
    %cst_23 = arith.constant 0.00999999977 : f32
    %39 = vector.broadcast %cst_23 : f32 to vector<16x256xf32>
    %40 = arith.addf %38, %39 : vector<16x256xf32>
    %c0_24 = arith.constant 0 : index
    %c0_25 = arith.constant 0 : index
    %41 = vector.load %arg8[%c0_24, %c0_25] : memref<16x256xf32, #tpu.memory_space<vmem>>, vector<16x256xf32>
    tpu.vector_store %arg8[%c0_24, %c0_25], %40 {strides = array<i32>} : memref<16x256xf32, #tpu.memory_space<vmem>>, vector<16x256xf32>,
    return
  }
  func.func @transform_0(%arg0: i32) -> (i32, i32) {
    %c0_i32 = arith.constant 0 : i32
    %c0_i32_0 = arith.constant 0 : i32
    return %arg0, %c0_i32 : i32, i32
  }
  func.func @transform_1(%arg0: i32) -> (i32, i32) {
    %c0_i32 = arith.constant 0 : i32
    %c0_i32_0 = arith.constant 0 : i32
    %c0_i32_1 = arith.constant 0 : i32
    return %c0_i32, %c0_i32_0 : i32, i32
  }
  func.func @transform_2(%arg0: i32) -> (i32, i32) {
    %c0_i32 = arith.constant 0 : i32
    %c0_i32_0 = arith.constant 0 : i32
    %c0_i32_1 = arith.constant 0 : i32
    return %c0_i32, %c0_i32_0 : i32, i32
  }
  func.func @transform_3(%arg0: i32) -> (i32, i32) {
    %c0_i32 = arith.constant 0 : i32
    %c0_i32_0 = arith.constant 0 : i32
    %c0_i32_1 = arith.constant 0 : i32
    return %c0_i32, %c0_i32_0 : i32, i32
  }
  func.func @transform_4(%arg0: i32) -> (i32, i32) {
    %c0_i32 = arith.constant 0 : i32
    %c0_i32_0 = arith.constant 0 : i32
    %c0_i32_1 = arith.constant 0 : i32
    return %c0_i32, %c0_i32_0 : i32, i32
  }
  func.func @transform_5(%arg0: i32) -> (i32, i32) {
    %c0_i32 = arith.constant 0 : i32
    %c0_i32_0 = arith.constant 0 : i32
    %c0_i32_1 = arith.constant 0 : i32
    return %c0_i32, %c0_i32_0 : i32, i32
  }
  func.func @transform_6(%arg0: i32) -> (i32, i32) {
    %c0_i32 = arith.constant 0 : i32
    %c0_i32_0 = arith.constant 0 : i32
    %c0_i32_1 = arith.constant 0 : i32
    return %c0_i32, %c0_i32_0 : i32, i32
  }
  func.func @transform_7(%arg0: i32) -> (i32, i32) {
    %c0_i32 = arith.constant 0 : i32
    %c0_i32_0 = arith.constant 0 : i32
    return %arg0, %c0_i32 : i32, i32
  }
}

</mosaic_0001>

<llo_original>
// kernel: tpu_custom_call.1
$region0: #{tpu_custom_call.1}
  #allocation0 [shape = 'u32[]', space=smem, size = 0x4, offset = 0x4, fixed_abs, tag = 'smem constant byte address 0x4 - core index']
  #allocation1 [shape = 'u32[72,128]{1,0:T(1,128)}', space=vmem, size = 0x9000, scoped, tag = 'internal scratch']
  %s0 = inlined_call_operand.hbm [shape: f32[16,256], index: 0, kind: input, shape index: {}]
  %s1 = inlined_call_operand.hbm [shape: bf16[256,128], index: 1, kind: input, shape index: {}]
  %s2 = inlined_call_operand.vmem [shape: f32[1,128], index: 2, kind: input, shape index: {}]
  %s3 = inlined_call_operand.hbm [shape: bf16[128,128], index: 3, kind: input, shape index: {}]
  %s4 = inlined_call_operand.hbm [shape: f32[1,128], index: 4, kind: input, shape index: {}]
  %s5 = inlined_call_operand.hbm [shape: bf16[128,256], index: 5, kind: input, shape index: {}]
  %s6 = inlined_call_operand.vmem [shape: f32[1,256], index: 6, kind: input, shape index: {}]
  %s7 = inlined_call_operand.hbm [shape: f32[16,256], index: 7, kind: output, shape index: {}]
  %s8 = sld [smem:[#allocation0]]
  $region58: #{tpu_custom_call.1} parent=0
    _
  %s10 = ssub.s32 1, %s8
  %s11 = scalar_select 0, %s10, %s8
  $region1: #{tpu_custom_call.1} parent=0
    #allocation2 [shape = 'u8[16384]{0}', space=vmem, size = 0x4000, scoped, tag = 'input window, operand 0, single buffered']
    #allocation3 [shape = 's32[1]{0}', space=sflag, size = 0x4, scoped, tag = 'scoped memory for tpu_custom_call.1']
    #allocation4 [shape = 's32[1]{0}', space=sflag, size = 0x4, scoped, tag = 'scoped memory for tpu_custom_call.1']
    #allocation5 [shape = 'u8[65536]{0}', space=vmem, size = 0x10000, scoped, tag = 'input window, operand 1, single buffered']
    #allocation6 [shape = 's32[1]{0}', space=sflag, size = 0x4, scoped, tag = 'scoped memory for tpu_custom_call.1']
    #allocation7 [shape = 'u8[32768]{0}', space=vmem, size = 0x8000, scoped, tag = 'input window, operand 3, single buffered']
    #allocation8 [shape = 'u8[512]{0}', space=vmem, size = 0x400, scoped, tag = 'input window, operand 4, single buffered']
    #allocation9 [shape = 's32[1]{0}', space=sflag, size = 0x4, scoped, tag = 'scoped memory for tpu_custom_call.1']
    #allocation10 [shape = 'u8[65536]{0}', space=vmem, size = 0x10000, scoped, tag = 'input window, operand 5, single buffered']
    #allocation11 [shape = 'u8[16384]{0}', space=vmem, size = 0x4000, scoped, tag = 'output window, operand 0, single buffered']
    %12 = vsyncpa [#allocation3], 0
    %13 = vsyncpa [#allocation6], 0
    %14 = vsyncpa [#allocation9], 0
    %15 = vsyncpa [#allocation4], 0
    // Predicated region
    $region2: #{tpu_custom_call.1} parent=1 // pred_check
      _
    $region3: #{tpu_custom_call.1} parent=1 // pred_check_branch
      %17 = sbr.rel (0) target = $region5
    $region4: #{tpu_custom_call.1} parent=1 // pred_region
      %19 = vsyncadd [#allocation3], 0
      %s20 = sshll.u32 %s0, 4
      %s21 = int_to_ptr.hbm [resolvable:$true] %s20
      %s22 = sshll.u32 [#allocation2], 4
      %s23 = int_to_ptr.vmem [resolvable:$true] %s22
      %28 = dma.hbm_to_vmem [thread:$0]  %s21, 512, %s23, [#allocation3], 256, 256, 16
    $region5: #{tpu_custom_call.1} parent=1 // pred_fallthru
      _
    // Predicated region
    $region6: #{tpu_custom_call.1} parent=1 // pred_check
      _
    $region7: #{tpu_custom_call.1} parent=1 // pred_check_branch
      %30 = sbr.rel (0) target = $region9
    $region8: #{tpu_custom_call.1} parent=1 // pred_region
      %32 = vsyncadd [#allocation6], 0
      %s33 = sshll.u32 %s1, 4
      %s34 = int_to_ptr.hbm [resolvable:$true] %s33
      %s35 = sshll.u32 [#allocation5], 4
      %s36 = int_to_ptr.vmem [resolvable:$true] %s35
      %41 = dma.hbm_to_vmem [thread:$0]  %s34, 2048, %s36, [#allocation6], 64, 64, 4
    $region9: #{tpu_custom_call.1} parent=1 // pred_fallthru
      _
    // Predicated region
    $region10: #{tpu_custom_call.1} parent=1 // pred_check
      _
    $region11: #{tpu_custom_call.1} parent=1 // pred_check_branch
      %43 = sbr.rel (0) target = $region13
    $region12: #{tpu_custom_call.1} parent=1 // pred_region
      _
    $region13: #{tpu_custom_call.1} parent=1 // pred_fallthru
      _
    // Predicated region
    $region14: #{tpu_custom_call.1} parent=1 // pred_check
      _
    $region15: #{tpu_custom_call.1} parent=1 // pred_check_branch
      %45 = sbr.rel (0) target = $region17
    $region16: #{tpu_custom_call.1} parent=1 // pred_region
      %47 = vsyncadd [#allocation6], 0
      %s48 = sshll.u32 %s3, 4
      %s49 = int_to_ptr.hbm [resolvable:$true] %s48
      %s50 = sshll.u32 [#allocation7], 4
      %s51 = int_to_ptr.vmem [resolvable:$true] %s50
      %56 = dma.hbm_to_vmem [thread:$0]  %s49, 1024, %s51, [#allocation6], 64, 64, 4
    $region17: #{tpu_custom_call.1} parent=1 // pred_fallthru
      _
    // Predicated region
    $region18: #{tpu_custom_call.1} parent=1 // pred_check
      _
    $region19: #{tpu_custom_call.1} parent=1 // pred_check_branch
      %58 = sbr.rel (0) target = $region21
    $region20: #{tpu_custom_call.1} parent=1 // pred_region
      %60 = vsyncadd [#allocation9], 0
      %s62 = sshll.u32 %s4, 4
      %s63 = int_to_ptr.hbm [resolvable:$true] %s62
      %s64 = sshll.u32 [#allocation8], 4
      %s65 = int_to_ptr.vmem [resolvable:$true] %s64
      %67 = dma.hbm_to_vmem [thread:$0]  %s63, 16, %s65, [#allocation9]
    $region21: #{tpu_custom_call.1} parent=1 // pred_fallthru
      _
    // Predicated region
    $region22: #{tpu_custom_call.1} parent=1 // pred_check
      _
    $region23: #{tpu_custom_call.1} parent=1 // pred_check_branch
      %69 = sbr.rel (0) target = $region25
    $region24: #{tpu_custom_call.1} parent=1 // pred_region
      %71 = vsyncadd [#allocation9], 0
      %s72 = sshll.u32 %s5, 4
      %s73 = int_to_ptr.hbm [resolvable:$true] %s72
      %s74 = sshll.u32 [#allocation10], 4
      %s75 = int_to_ptr.vmem [resolvable:$true] %s74
      %80 = dma.hbm_to_vmem [thread:$0]  %s73, 2048, %s75, [#allocation9], 128, 128, 8
    $region25: #{tpu_custom_call.1} parent=1 // pred_fallthru
      _
    // Predicated region
    $region26: #{tpu_custom_call.1} parent=1 // pred_check
      _
    $region27: #{tpu_custom_call.1} parent=1 // pred_check_branch
      %82 = sbr.rel (0) target = $region29
    $region28: #{tpu_custom_call.1} parent=1 // pred_region
      _
    $region29: #{tpu_custom_call.1} parent=1 // pred_fallthru
      _
    // Predicated region
    $region30: #{tpu_custom_call.1} parent=1 // pred_check
      _
    $region31: #{tpu_custom_call.1} parent=1 // pred_check_branch
      %84 = sbr.rel (0) target = $region33
    $region32: #{tpu_custom_call.1} parent=1 // pred_region
      %86 = dma.done [#allocation3], 512
    $region33: #{tpu_custom_call.1} parent=1 // pred_fallthru
      _
    // Predicated region
    $region34: #{tpu_custom_call.1} parent=1 // pred_check
      _
    $region35: #{tpu_custom_call.1} parent=1 // pred_check_branch
      %88 = sbr.rel (0) target = $region37
    $region36: #{tpu_custom_call.1} parent=1 // pred_region
      %90 = dma.done [#allocation6], 2048
    $region37: #{tpu_custom_call.1} parent=1 // pred_fallthru
      _
    // Predicated region
    $region38: #{tpu_custom_call.1} parent=1 // pred_check
      _
    $region39: #{tpu_custom_call.1} parent=1 // pred_check_branch
      %92 = sbr.rel (0) target = $region41
    $region40: #{tpu_custom_call.1} parent=1 // pred_region
      %94 = dma.done [#allocation6], 1024
    $region41: #{tpu_custom_call.1} parent=1 // pred_fallthru
      _
    // Predicated region
    $region42: #{tpu_custom_call.1} parent=1 // pred_check
      _
    $region43: #{tpu_custom_call.1} parent=1 // pred_check_branch
      %96 = sbr.rel (0) target = $region45
    $region44: #{tpu_custom_call.1} parent=1 // pred_region
      %98 = dma.done [#allocation9], 16
    $region45: #{tpu_custom_call.1} parent=1 // pred_fallthru
      _
    // Predicated region
    $region46: #{tpu_custom_call.1} parent=1 // pred_check
      _
    $region47: #{tpu_custom_call.1} parent=1 // pred_check_branch
      %100 = sbr.rel (0) target = $region49
    $region48: #{tpu_custom_call.1} parent=1 // pred_region
      %102 = dma.done [#allocation9], 2048
    $region49: #{tpu_custom_call.1} parent=1 // pred_fallthru
      _
    %v103 = vld [vmem:[#allocation2] sm:$0xff]
    %v104 = vld [vmem:[#allocation2 + $0x8] sm:$0xff]
    %v105 = vld [vmem:[#allocation2 + $0x10] sm:$0xff]
    %v106 = vld [vmem:[#allocation2 + $0x18] sm:$0xff]
    %v107 = vpack.c.bf16 %v105, %v103
    %v108 = vpack.c.bf16 %v106, %v104
    %v109 = vld [vmem:[#allocation5] sm:$0xf]
    %v110 = vld [vmem:[#allocation5 + $0x4] sm:$0xf]
    %v111 = vld [vmem:[#allocation5 + $0x8] sm:$0xf]
    %v112 = vld [vmem:[#allocation5 + $0xc] sm:$0xf]
    %v113 = vld [vmem:[#allocation5 + $0x10] sm:$0xf]
    %v114 = vld [vmem:[#allocation5 + $0x14] sm:$0xf]
    %v115 = vld [vmem:[#allocation5 + $0x18] sm:$0xf]
    %v116 = vld [vmem:[#allocation5 + $0x1c] sm:$0xf]
    %v117 = vld [vmem:[#allocation5 + $0x20] sm:$0xf]
    %v118 = vld [vmem:[#allocation5 + $0x24] sm:$0xf]
    %v119 = vld [vmem:[#allocation5 + $0x28] sm:$0xf]
    %v120 = vld [vmem:[#allocation5 + $0x2c] sm:$0xf]
    %v121 = vld [vmem:[#allocation5 + $0x30] sm:$0xf]
    %v122 = vld [vmem:[#allocation5 + $0x34] sm:$0xf]
    %v123 = vld [vmem:[#allocation5 + $0x38] sm:$0xf]
    %v124 = vld [vmem:[#allocation5 + $0x3c] sm:$0xf]
    %v125 = vld [vmem:[#allocation5 + $0x40] sm:$0xf]
    %v126 = vld [vmem:[#allocation5 + $0x44] sm:$0xf]
    %v127 = vld [vmem:[#allocation5 + $0x48] sm:$0xf]
    %v128 = vld [vmem:[#allocation5 + $0x4c] sm:$0xf]
    %v129 = vld [vmem:[#allocation5 + $0x50] sm:$0xf]
    %v130 = vld [vmem:[#allocation5 + $0x54] sm:$0xf]
    %v131 = vld [vmem:[#allocation5 + $0x58] sm:$0xf]
    %v132 = vld [vmem:[#allocation5 + $0x5c] sm:$0xf]
    %v133 = vld [vmem:[#allocation5 + $0x60] sm:$0xf]
    %v134 = vld [vmem:[#allocation5 + $0x64] sm:$0xf]
    %v135 = vld [vmem:[#allocation5 + $0x68] sm:$0xf]
    %v136 = vld [vmem:[#allocation5 + $0x6c] sm:$0xf]
    %v137 = vld [vmem:[#allocation5 + $0x70] sm:$0xf]
    %v138 = vld [vmem:[#allocation5 + $0x74] sm:$0xf]
    %v139 = vld [vmem:[#allocation5 + $0x78] sm:$0xf]
    %v140 = vld [vmem:[#allocation5 + $0x7c] sm:$0xf]
    %v141 = vld [vmem:[%s2] sm:$0x1]
    %v143 = vperm.slane %v141, 0
    %v177 = vunpack.c.l.b16 %v109
    %v178 = vunpack.c.l.b16 %v110
    %v179 = vunpack.c.l.b16 %v111
    %v180 = vunpack.c.l.b16 %v112
    %v181 = vunpack.c.l.b16 %v113
    %v182 = vunpack.c.l.b16 %v114
    %v183 = vunpack.c.l.b16 %v115
    %v184 = vunpack.c.l.b16 %v116
    %v185 = vunpack.c.l.b16 %v117
    %v186 = vunpack.c.l.b16 %v118
    %v187 = vunpack.c.l.b16 %v119
    %v188 = vunpack.c.l.b16 %v120
    %v189 = vunpack.c.l.b16 %v121
    %v190 = vunpack.c.l.b16 %v122
    %v191 = vunpack.c.l.b16 %v123
    %v192 = vunpack.c.l.b16 %v124
    %v193 = vunpack.c.l.b16 %v125
    %v194 = vunpack.c.l.b16 %v126
    %v195 = vunpack.c.l.b16 %v127
    %v196 = vunpack.c.l.b16 %v128
    %v197 = vunpack.c.l.b16 %v129
    %v198 = vunpack.c.l.b16 %v130
    %v199 = vunpack.c.l.b16 %v131
    %v200 = vunpack.c.l.b16 %v132
    %v201 = vunpack.c.l.b16 %v133
    %v202 = vunpack.c.l.b16 %v134
    %v203 = vunpack.c.l.b16 %v135
    %v204 = vunpack.c.l.b16 %v136
    %v205 = vunpack.c.l.b16 %v137
    %v206 = vunpack.c.l.b16 %v138
    %v207 = vunpack.c.l.b16 %v139
    %v208 = vunpack.c.l.b16 %v140
    %v209 = vpack.c.b16 %v178, %v177
    %v210 = vpack.c.b16 %v180, %v179
    %v211 = vpack.c.b16 %v182, %v181
    %v212 = vpack.c.b16 %v184, %v183
    %v213 = vpack.c.b16 %v186, %v185
    %v214 = vpack.c.b16 %v188, %v187
    %v215 = vpack.c.b16 %v190, %v189
    %v216 = vpack.c.b16 %v192, %v191
    %v217 = vpack.c.b16 %v194, %v193
    %v218 = vpack.c.b16 %v196, %v195
    %v219 = vpack.c.b16 %v198, %v197
    %v220 = vpack.c.b16 %v200, %v199
    %v221 = vpack.c.b16 %v202, %v201
    %v222 = vpack.c.b16 %v204, %v203
    %v223 = vpack.c.b16 %v206, %v205
    %v224 = vpack.c.b16 %v208, %v207
    %241 = vmatpush.bf16.msra.mxu0 %v216
    %242 = vmatpush.bf16.msra.mxu0 %v215
    %243 = vmatpush.bf16.msra.mxu0 %v214
    %244 = vmatpush.bf16.msra.mxu0 %v213
    %245 = vmatpush.bf16.msra.mxu0 %v212
    %246 = vmatpush.bf16.msra.mxu0 %v211
    %247 = vmatpush.bf16.msra.mxu0 %v210
    %248 = vmatpush.bf16.msra.mxu0 %v209
    %249 = vmatmul.bf16.gmra.mxu0 %v107
    %v250 = vpop.f32.mrf.mxu0
    %v251 = vadd.f32 %v143, %v250
    %v252 = vpop.f32.mrf.mxu0
    %v253 = vadd.f32 %v143, %v252
    %254 = vdwg.mxu0
    %255 = vmatpush.bf16.msra.mxu0 %v224
    %256 = vmatpush.bf16.msra.mxu0 %v223
    %257 = vmatpush.bf16.msra.mxu0 %v222
    %258 = vmatpush.bf16.msra.mxu0 %v221
    %259 = vmatpush.bf16.msra.mxu0 %v220
    %260 = vmatpush.bf16.msra.mxu0 %v219
    %261 = vmatpush.bf16.msra.mxu0 %v218
    %262 = vmatpush.bf16.msra.mxu0 %v217
    %263 = vmatmul.bf16.gmra.mxu0 %v108
    %v264 = vpop.f32.mrf.mxu0
    %v265 = vadd.f32 %v251, %v264
    %v266 = vpop.f32.mrf.mxu0
    %v267 = vadd.f32 %v253, %v266
    %268 = vdwg.mxu0
    %vm269 = vcmp.ge.f32.partialorder %v265, 0.0
    %vm270 = vcmp.ge.f32.partialorder %v267, 0.0
    %v271 = vmul.f32 %v265, 0.01
    %v272 = vmul.f32 %v267, 0.01
    %v273 = vsel %vm269, %v265, %v271
    %v274 = vsel %vm270, %v267, %v272
    %v275 = vpack.c.bf16 %v274, %v273
    %v276 = vld [vmem:[#allocation7] sm:$0xf]
    %v277 = vld [vmem:[#allocation7 + $0x4] sm:$0xf]
    %v278 = vld [vmem:[#allocation7 + $0x8] sm:$0xf]
    %v279 = vld [vmem:[#allocation7 + $0xc] sm:$0xf]
    %v280 = vld [vmem:[#allocation7 + $0x10] sm:$0xf]
    %v281 = vld [vmem:[#allocation7 + $0x14] sm:$0xf]
    %v282 = vld [vmem:[#allocation7 + $0x18] sm:$0xf]
    %v283 = vld [vmem:[#allocation7 + $0x1c] sm:$0xf]
    %v284 = vld [vmem:[#allocation7 + $0x20] sm:$0xf]
    %v285 = vld [vmem:[#allocation7 + $0x24] sm:$0xf]
    %v286 = vld [vmem:[#allocation7 + $0x28] sm:$0xf]
    %v287 = vld [vmem:[#allocation7 + $0x2c] sm:$0xf]
    %v288 = vld [vmem:[#allocation7 + $0x30] sm:$0xf]
    %v289 = vld [vmem:[#allocation7 + $0x34] sm:$0xf]
    %v290 = vld [vmem:[#allocation7 + $0x38] sm:$0xf]
    %v291 = vld [vmem:[#allocation7 + $0x3c] sm:$0xf]
    %v292 = vld [vmem:[#allocation8] sm:$0x1]
    %v294 = vperm.slane %v292, 0
    %v312 = vunpack.c.l.b16 %v276
    %v313 = vunpack.c.l.b16 %v277
    %v314 = vunpack.c.l.b16 %v278
    %v315 = vunpack.c.l.b16 %v279
    %v316 = vunpack.c.l.b16 %v280
    %v317 = vunpack.c.l.b16 %v281
    %v318 = vunpack.c.l.b16 %v282
    %v319 = vunpack.c.l.b16 %v283
    %v320 = vunpack.c.l.b16 %v284
    %v321 = vunpack.c.l.b16 %v285
    %v322 = vunpack.c.l.b16 %v286
    %v323 = vunpack.c.l.b16 %v287
    %v324 = vunpack.c.l.b16 %v288
    %v325 = vunpack.c.l.b16 %v289
    %v326 = vunpack.c.l.b16 %v290
    %v327 = vunpack.c.l.b16 %v291
    %v328 = vpack.c.b16 %v313, %v312
    %v329 = vpack.c.b16 %v315, %v314
    %v330 = vpack.c.b16 %v317, %v316
    %v331 = vpack.c.b16 %v319, %v318
    %v332 = vpack.c.b16 %v321, %v320
    %v333 = vpack.c.b16 %v323, %v322
    %v334 = vpack.c.b16 %v325, %v324
    %v335 = vpack.c.b16 %v327, %v326
    %344 = vmatpush.bf16.msra.mxu0 %v335
    %345 = vmatpush.bf16.msra.mxu0 %v334
    %346 = vmatpush.bf16.msra.mxu0 %v333
    %347 = vmatpush.bf16.msra.mxu0 %v332
    %348 = vmatpush.bf16.msra.mxu0 %v331
    %349 = vmatpush.bf16.msra.mxu0 %v330
    %350 = vmatpush.bf16.msra.mxu0 %v329
    %351 = vmatpush.bf16.msra.mxu0 %v328
    %352 = vmatmul.bf16.gmra.mxu0 %v275
    %v353 = vpop.f32.mrf.mxu0
    %v354 = vadd.f32 %v294, %v353
    %v355 = vpop.f32.mrf.mxu0
    %v356 = vadd.f32 %v294, %v355
    %357 = vdwg.mxu0
    %vm358 = vcmp.ge.f32.partialorder %v354, 0.0
    %vm359 = vcmp.ge.f32.partialorder %v356, 0.0
    %v360 = vmul.f32 %v354, 0.01
    %v361 = vmul.f32 %v356, 0.01
    %v362 = vsel %vm358, %v354, %v360
    %v363 = vsel %vm359, %v356, %v361
    %v364 = vpack.c.bf16 %v363, %v362
    %v365 = vld [vmem:[#allocation10] sm:$0xff]
    %v366 = vld [vmem:[#allocation10 + $0x8] sm:$0xff]
    %v367 = vld [vmem:[#allocation10 + $0x10] sm:$0xff]
    %v368 = vld [vmem:[#allocation10 + $0x18] sm:$0xff]
    %v369 = vld [vmem:[#allocation10 + $0x20] sm:$0xff]
    %v370 = vld [vmem:[#allocation10 + $0x28] sm:$0xff]
    %v371 = vld [vmem:[#allocation10 + $0x30] sm:$0xff]
    %v372 = vld [vmem:[#allocation10 + $0x38] sm:$0xff]
    %v373 = vld [vmem:[#allocation10 + $0x40] sm:$0xff]
    %v374 = vld [vmem:[#allocation10 + $0x48] sm:$0xff]
    %v375 = vld [vmem:[#allocation10 + $0x50] sm:$0xff]
    %v376 = vld [vmem:[#allocation10 + $0x58] sm:$0xff]
    %v377 = vld [vmem:[#allocation10 + $0x60] sm:$0xff]
    %v378 = vld [vmem:[#allocation10 + $0x68] sm:$0xff]
    %v379 = vld [vmem:[#allocation10 + $0x70] sm:$0xff]
    %v380 = vld [vmem:[#allocation10 + $0x78] sm:$0xff]
    %v381 = vld [vmem:[%s6] sm:$0x3]
    %v383 = vperm.slane %v381, 0
    %v384 = vperm.slane %v381, 1
    %v403 = vunpack.c.l.b16 %v365
    %v404 = vunpack.c.h.b16 %v365
    %v405 = vunpack.c.l.b16 %v366
    %v406 = vunpack.c.h.b16 %v366
    %v407 = vunpack.c.l.b16 %v367
    %v408 = vunpack.c.h.b16 %v367
    %v409 = vunpack.c.l.b16 %v368
    %v410 = vunpack.c.h.b16 %v368
    %v411 = vunpack.c.l.b16 %v369
    %v412 = vunpack.c.h.b16 %v369
    %v413 = vunpack.c.l.b16 %v370
    %v414 = vunpack.c.h.b16 %v370
    %v415 = vunpack.c.l.b16 %v371
    %v416 = vunpack.c.h.b16 %v371
    %v417 = vunpack.c.l.b16 %v372
    %v418 = vunpack.c.h.b16 %v372
    %v419 = vunpack.c.l.b16 %v373
    %v420 = vunpack.c.h.b16 %v373
    %v421 = vunpack.c.l.b16 %v374
    %v422 = vunpack.c.h.b16 %v374
    %v423 = vunpack.c.l.b16 %v375
    %v424 = vunpack.c.h.b16 %v375
    %v425 = vunpack.c.l.b16 %v376
    %v426 = vunpack.c.h.b16 %v376
    %v427 = vunpack.c.l.b16 %v377
    %v428 = vunpack.c.h.b16 %v377
    %v429 = vunpack.c.l.b16 %v378
    %v430 = vunpack.c.h.b16 %v378
    %v431 = vunpack.c.l.b16 %v379
    %v432 = vunpack.c.h.b16 %v379
    %v433 = vunpack.c.l.b16 %v380
    %v434 = vunpack.c.h.b16 %v380
    %v435 = vpack.c.b16 %v405, %v403
    %v436 = vpack.c.b16 %v406, %v404
    %v437 = vpack.c.b16 %v409, %v407
    %v438 = vpack.c.b16 %v410, %v408
    %v439 = vpack.c.b16 %v413, %v411
    %v440 = vpack.c.b16 %v414, %v412
    %v441 = vpack.c.b16 %v417, %v415
    %v442 = vpack.c.b16 %v418, %v416
    %v443 = vpack.c.b16 %v421, %v419
    %v444 = vpack.c.b16 %v422, %v420
    %v445 = vpack.c.b16 %v425, %v423
    %v446 = vpack.c.b16 %v426, %v424
    %v447 = vpack.c.b16 %v429, %v427
    %v448 = vpack.c.b16 %v430, %v428
    %v449 = vpack.c.b16 %v433, %v431
    %v450 = vpack.c.b16 %v434, %v432
    %467 = vmatpush.bf16.msra.mxu0 %v449
    %468 = vmatpush.bf16.msra.mxu0 %v447
    %469 = vmatpush.bf16.msra.mxu0 %v445
    %470 = vmatpush.bf16.msra.mxu0 %v443
    %471 = vmatpush.bf16.msra.mxu0 %v441
    %472 = vmatpush.bf16.msra.mxu0 %v439
    %473 = vmatpush.bf16.msra.mxu0 %v437
    %474 = vmatpush.bf16.msra.mxu0 %v435
    %475 = vmatmul.bf16.gmra.mxu0 %v364
    %v476 = vpop.f32.mrf.mxu0
    %v477 = vadd.f32 %v383, %v476
    %v478 = vpop.f32.mrf.mxu0
    %v479 = vadd.f32 %v383, %v478
    %480 = vdwg.mxu0
    %481 = vmatpush.bf16.msra.mxu0 %v450
    %482 = vmatpush.bf16.msra.mxu0 %v448
    %483 = vmatpush.bf16.msra.mxu0 %v446
    %484 = vmatpush.bf16.msra.mxu0 %v444
    %485 = vmatpush.bf16.msra.mxu0 %v442
    %486 = vmatpush.bf16.msra.mxu0 %v440
    %487 = vmatpush.bf16.msra.mxu0 %v438
    %488 = vmatpush.bf16.msra.mxu0 %v436
    %489 = vmatmul.bf16.gmra.mxu0 %v364
    %v490 = vpop.f32.mrf.mxu0
    %v491 = vadd.f32 %v384, %v490
    %v492 = vpop.f32.mrf.mxu0
    %v493 = vadd.f32 %v384, %v492
    %494 = vdwg.mxu0
    %v495 = vmin.f32 %v477, 0.0
    %v496 = vmin.f32 %v491, 0.0
    %v497 = vmin.f32 %v479, 0.0
    %v498 = vmin.f32 %v493, 0.0
    %v499 = vmul.f32 %v495, 1.442695
    %v500 = vpow.pop %v499
    %v501 = vmul.f32 %v496, 1.442695
    %v502 = vpow.pop %v501
    %v503 = vmul.f32 %v497, 1.442695
    %v504 = vpow.pop %v503
    %v505 = vmul.f32 %v498, 1.442695
    %v506 = vpow.pop %v505
    %v507 = vsub.f32 %v500, 1.0
    %v508 = vsub.f32 %v502, 1.0
    %v509 = vsub.f32 %v504, 1.0
    %v510 = vsub.f32 %v506, 1.0
    %v511 = vmul.f32 %v507, 0.01
    %v512 = vmul.f32 %v508, 0.01
    %v513 = vmul.f32 %v509, 0.01
    %v514 = vmul.f32 %v510, 0.01
    %vm515 = vcmp.gt.f32.partialorder %v477, 0.0
    %vm516 = vcmp.gt.f32.partialorder %v491, 0.0
    %vm517 = vcmp.gt.f32.partialorder %v479, 0.0
    %vm518 = vcmp.gt.f32.partialorder %v493, 0.0
    %v519 = vsel %vm515, %v477, %v511
    %v520 = vsel %vm516, %v491, %v512
    %v521 = vsel %vm517, %v479, %v513
    %v522 = vsel %vm518, %v493, %v514
    %v523 = vadd.f32 %v519, 0.01
    %v524 = vadd.f32 %v520, 0.01
    %v525 = vadd.f32 %v521, 0.01
    %v526 = vadd.f32 %v522, 0.01
    %527 = vst [vmem:[#allocation11] sm:$0xff] %v523
    %528 = vst [vmem:[#allocation11 + $0x8] sm:$0xff] %v524
    %529 = vst [vmem:[#allocation11 + $0x10] sm:$0xff] %v525
    %530 = vst [vmem:[#allocation11 + $0x18] sm:$0xff] %v526
    // Predicated region
    $region50: #{tpu_custom_call.1} parent=1 // pred_check
      _
    $region51: #{tpu_custom_call.1} parent=1 // pred_check_branch
      %532 = sbr.rel (0) target = $region53
    $region52: #{tpu_custom_call.1} parent=1 // pred_region
      %534 = vsyncadd [#allocation4], 0
      %s535 = sshll.u32 [#allocation11], 4
      %s536 = int_to_ptr.vmem [resolvable:$true] %s535
      %s537 = sshll.u32 %s7, 4
      %s538 = int_to_ptr.hbm [resolvable:$true] %s537
      %543 = dma.vmem_to_hbm [thread:$0]  %s536, 512, %s538, [#allocation4], 256, 256, 16
    $region53: #{tpu_custom_call.1} parent=1 // pred_fallthru
      _
    // Predicated region
    $region54: #{tpu_custom_call.1} parent=1 // pred_check
      _
    $region55: #{tpu_custom_call.1} parent=1 // pred_check_branch
      %545 = sbr.rel (0) target = $region57
    $region56: #{tpu_custom_call.1} parent=1 // pred_region
      %547 = dma.done [#allocation4], 512
    $region57: #{tpu_custom_call.1} parent=1 // pred_fallthru
      _
    %548 = vsyncpa [#allocation3], 1
    %549 = vsyncpa [#allocation6], 1
    %550 = vsyncpa [#allocation9], 1
    %551 = vsyncpa [#allocation4], 1

</llo_original>
